<compile_context>
chip_gen: v7x
topology: tpu7x:2x2x1
jax: 0.10.0
libtpu: 0.0.40
codegen_flags: <defaults>
</compile_context>

<pallas_src>
import jax
import jax.numpy as jnp
from jax.experimental import pallas as pl
from jax.experimental.pallas import tpu as pltpu


def _round_up(n, m):
    return ((n + m - 1) // m) * m


def _mlp_kernel(x_ref,
                w1_ref, b1_ref,
                w2_ref, b2_ref,
                w3_ref, b3_ref,
                w4_ref, b4_ref,
                w5_ref, b5_ref,
                out_ref):
    """Whole 5-layer MLP on one batch tile.

    Matmul operands are bf16 (MXU-native on v5e/v6e/v7x), accumulation is f32;
    bias add / ReLU run on the VPU in f32, tanh on the EUP in f32.
    """

    def hidden_layer(h, w_ref, b_ref):
        acc = jnp.dot(h, w_ref[...], preferred_element_type=jnp.float32)
        acc = acc + b_ref[...]                       # (1, H) f32 broadcast
        return jnp.maximum(acc, 0.0).astype(jnp.bfloat16)

    h = x_ref[...]                                   # (T, in) bf16
    h = hidden_layer(h, w1_ref, b1_ref)
    h = hidden_layer(h, w2_ref, b2_ref)
    h = hidden_layer(h, w3_ref, b3_ref)
    h = hidden_layer(h, w4_ref, b4_ref)

    y = jnp.dot(h, w5_ref[...], preferred_element_type=jnp.float32) + b5_ref[...]
    out_ref[...] = jnp.tanh(y)                       # (T, 128) f32, lane-dense


def weight_generator_forward(x, params, *, batch_tile=None):
    """Pallas implementation of WeightGenerator.forward.

    x: (B, input_size) float32
    params: dict with w1..w5 of shape (in, out) and b1..b5 of shape (1, out).
    returns: (B, 5) float32
    """
    B, in_features = x.shape
    n_out = params["w5"].shape[1]

    # ---- pick / sanitize the batch tile -------------------------------
    if batch_tile is None:
        # Large tiles amortize the ~0.35us/step grid overhead and feed the
        # MXU full rows, but keep >=2 grid steps when the batch allows it so
        # the "parallel" batch axis can shard across v7x's 2 TensorCores.
        batch_tile = min(512, _round_up(max(B // 2, 1), 16))
    # bf16 x-tiles want a multiple of 16 on the sublane axis (f32 needs 8);
    # round up instead of asserting so callers can pass anything.
    batch_tile = _round_up(max(int(batch_tile), 16), 16)

    # ---- pad batch to a whole number of tiles (ragged batches OK) ------
    B_pad = _round_up(B, batch_tile)
    x_p = jnp.pad(x, ((0, B_pad - B), (0, 0))) if B_pad != B else x
    x_bf = x_p.astype(jnp.bfloat16)

    # ---- lane-dense output: pad fc_out to 128 columns ------------------
    n_out_p = _round_up(n_out, 128)
    w5 = jnp.pad(params["w5"], ((0, 0), (0, n_out_p - n_out)))
    b5 = jnp.pad(params["b5"], ((0, 0), (0, n_out_p - n_out)))

    flat_params = [
        params["w1"].astype(jnp.bfloat16), params["b1"].astype(jnp.float32),
        params["w2"].astype(jnp.bfloat16), params["b2"].astype(jnp.float32),
        params["w3"].astype(jnp.bfloat16), params["b3"].astype(jnp.float32),
        params["w4"].astype(jnp.bfloat16), params["b4"].astype(jnp.float32),
        w5.astype(jnp.bfloat16), b5.astype(jnp.float32),
    ]

    # x/out are tiled along batch; every weight/bias is the full (tiny) array
    # with a constant index_map, so it is DMA'd once and stays VMEM-resident
    # across grid steps (default double-buffering costs ~80 KB total).
    full = lambda arr: pl.BlockSpec(arr.shape, lambda i: (0, 0))
    in_specs = [pl.BlockSpec((batch_tile, in_features), lambda i: (i, 0))]
    in_specs += [full(p) for p in flat_params]
    out_spec = pl.BlockSpec((batch_tile, n_out_p), lambda i: (i, 0))

    out_padded = pl.pallas_call(
        _mlp_kernel,
        out_shape=jax.ShapeDtypeStruct((B_pad, n_out_p), jnp.float32),
        grid_spec=pltpu.PrefetchScalarGridSpec(
            num_scalar_prefetch=0,
            grid=(B_pad // batch_tile,),
            in_specs=in_specs,
            out_specs=out_spec,
        ),
        compiler_params=pltpu.CompilerParams(
            dimension_semantics=("parallel",),
            vmem_limit_bytes=48 << 20,   # headroom for large batch tiles
        ),
    )(x_bf, *flat_params)

    return out_padded[:B, :n_out]


def init_params(key, input_size, hidden_size=64, out_size=5):
    """Deterministic init mimicking nn.Linear's U(-1/sqrt(fan_in), +1/sqrt(fan_in))."""
    dims = [(input_size, hidden_size),
            (hidden_size, hidden_size),
            (hidden_size, hidden_size),
            (hidden_size, hidden_size),
            (hidden_size, out_size)]
    params = {}
    for idx, (fan_in, fan_out) in enumerate(dims, start=1):
        key, kw, kb = jax.random.split(key, 3)
        bound = 1.0 / jnp.sqrt(jnp.float32(fan_in))
        params[f"w{idx}"] = jax.random.uniform(
            kw, (fan_in, fan_out), jnp.float32, -bound, bound)
        params[f"b{idx}"] = jax.random.uniform(
            kb, (1, fan_out), jnp.float32, -bound, bound)
    return params


def reference_forward_f32(x, params):
    h = x
    for idx in range(1, 5):
        h = jnp.maximum(h @ params[f"w{idx}"] + params[f"b{idx}"], 0.0)
    return jnp.tanh(h @ params["w5"] + params["b5"])


def reference_forward_bf16(x, params):
    """Same bf16-operand / f32-accumulate recipe the kernel uses."""
    h = x.astype(jnp.bfloat16)
    for idx in range(1, 5):
        a = jnp.dot(h, params[f"w{idx}"].astype(jnp.bfloat16),
                    preferred_element_type=jnp.float32) + params[f"b{idx}"]
        h = jnp.maximum(a, 0.0).astype(jnp.bfloat16)
    y = jnp.dot(h, params["w5"].astype(jnp.bfloat16),
                preferred_element_type=jnp.float32) + params["b5"]
    return jnp.tanh(y)


if __name__ == "__main__":
    key = jax.random.PRNGKey(0)
    k_params, k_x = jax.random.split(key)

    input_size = 32
    hidden_size = 64
    batch = 32            # small demo; auto tile -> 16 rows, 2 grid steps

    params = init_params(k_params, input_size, hidden_size)
    x = jax.random.normal(k_x, (batch, input_size), jnp.float32)

    out = weight_generator_forward(x, params)
    out = jax.block_until_ready(out)
    assert out.shape == (batch, 5)

    ref_bf16 = reference_forward_bf16(x, params)
    ref_f32 = reference_forward_f32(x, params)
    assert jnp.allclose(out, ref_bf16, atol=1e-3, rtol=1e-3), "mismatch vs bf16 reference"
    assert jnp.allclose(out, ref_f32, atol=5e-2, rtol=5e-2), "mismatch vs f32 reference"

    print("KERNEL_OK")
</pallas_src>

<mosaic_0001>
module attributes {stable_mosaic.version = 11 : i64} {
  func.func @_mlp_kernel(%arg0: i32, %arg1: memref<16x32xbf16, #tpu.memory_space<vmem>>, %arg2: memref<32x64xbf16, #tpu.memory_space<vmem>>, %arg3: memref<1x64xf32, #tpu.memory_space<vmem>>, %arg4: memref<64x64xbf16, #tpu.memory_space<vmem>>, %arg5: memref<1x64xf32, #tpu.memory_space<vmem>>, %arg6: memref<64x64xbf16, #tpu.memory_space<vmem>>, %arg7: memref<1x64xf32, #tpu.memory_space<vmem>>, %arg8: memref<64x64xbf16, #tpu.memory_space<vmem>>, %arg9: memref<1x64xf32, #tpu.memory_space<vmem>>, %arg10: memref<64x128xbf16, #tpu.memory_space<vmem>>, %arg11: memref<1x128xf32, #tpu.memory_space<vmem>>, %arg12: memref<16x128xf32, #tpu.memory_space<vmem>>) attributes {dimension_semantics = [#tpu.dimension_semantics<parallel>], iteration_bounds = array<i64: 2>, scalar_prefetch = 0 : i64, scratch_operands = 0 : i64, tpu.core_type = #tpu.core_type<tc>, window_params = [{transform_indices = @transform_0, window_bounds = array<i64: 16, 32>}, {pipeline_mode = #tpu.pipeline_mode<synchronous>, transform_indices = @transform_1, window_bounds = array<i64: 32, 64>}, {pipeline_mode = #tpu.pipeline_mode<synchronous>, transform_indices = @transform_2, window_bounds = array<i64: 1, 64>}, {pipeline_mode = #tpu.pipeline_mode<synchronous>, transform_indices = @transform_3, window_bounds = array<i64: 64, 64>}, {pipeline_mode = #tpu.pipeline_mode<synchronous>, transform_indices = @transform_4, window_bounds = array<i64: 1, 64>}, {pipeline_mode = #tpu.pipeline_mode<synchronous>, transform_indices = @transform_5, window_bounds = array<i64: 64, 64>}, {pipeline_mode = #tpu.pipeline_mode<synchronous>, transform_indices = @transform_6, window_bounds = array<i64: 1, 64>}, {pipeline_mode = #tpu.pipeline_mode<synchronous>, transform_indices = @transform_7, window_bounds = array<i64: 64, 64>}, {pipeline_mode = #tpu.pipeline_mode<synchronous>, transform_indices = @transform_8, window_bounds = array<i64: 1, 64>}, {pipeline_mode = #tpu.pipeline_mode<synchronous>, transform_indices = @transform_9, window_bounds = array<i64: 64, 128>}, {pipeline_mode = #tpu.pipeline_mode<synchronous>, transform_indices = @transform_10, window_bounds = array<i64: 1, 128>}, {transform_indices = @transform_11, window_bounds = array<i64: 16, 128>}]} {
    %c0 = arith.constant 0 : index
    %c0_0 = arith.constant 0 : index
    %0 = vector.load %arg1[%c0, %c0_0] : memref<16x32xbf16, #tpu.memory_space<vmem>>, vector<16x32xbf16>
    %c0_1 = arith.constant 0 : index
    %c0_2 = arith.constant 0 : index
    %1 = vector.load %arg2[%c0_1, %c0_2] : memref<32x64xbf16, #tpu.memory_space<vmem>>, vector<32x64xbf16>
    %cst = arith.constant dense<0.000000e+00> : vector<16x64xf32>
    %2 = tpu.matmul %0, %1, %cst {dimension_numbers = #tpu.dot_dimension_numbers<[1], [0], [0], [1], [0, 0, 1, 1], [], []>} : vector<16x32xbf16>, vector<32x64xbf16>, vector<16x64xf32> -> vector<16x64xf32>
    %c0_3 = arith.constant 0 : index
    %c0_4 = arith.constant 0 : index
    %3 = vector.load %arg3[%c0_3, %c0_4] : memref<1x64xf32, #tpu.memory_space<vmem>>, vector<1x64xf32>
    %4 = vector.broadcast %3 : vector<1x64xf32> to vector<16x64xf32>
    %5 = arith.addf %2, %4 : vector<16x64xf32>
    %cst_5 = arith.constant 0.000000e+00 : f32
    %6 = vector.broadcast %cst_5 : f32 to vector<16x64xf32>
    %7 = arith.maximumf %5, %6 : vector<16x64xf32>
    %8 = arith.truncf %7 : vector<16x64xf32> to vector<16x64xbf16>
    %c0_6 = arith.constant 0 : index
    %c0_7 = arith.constant 0 : index
    %9 = vector.load %arg4[%c0_6, %c0_7] : memref<64x64xbf16, #tpu.memory_space<vmem>>, vector<64x64xbf16>
    %cst_8 = arith.constant dense<0.000000e+00> : vector<16x64xf32>
    %10 = tpu.matmul %8, %9, %cst_8 {dimension_numbers = #tpu.dot_dimension_numbers<[1], [0], [0], [1], [0, 0, 1, 1], [], []>} : vector<16x64xbf16>, vector<64x64xbf16>, vector<16x64xf32> -> vector<16x64xf32>
    %c0_9 = arith.constant 0 : index
    %c0_10 = arith.constant 0 : index
    %11 = vector.load %arg5[%c0_9, %c0_10] : memref<1x64xf32, #tpu.memory_space<vmem>>, vector<1x64xf32>
    %12 = vector.broadcast %11 : vector<1x64xf32> to vector<16x64xf32>
    %13 = arith.addf %10, %12 : vector<16x64xf32>
    %cst_11 = arith.constant 0.000000e+00 : f32
    %14 = vector.broadcast %cst_11 : f32 to vector<16x64xf32>
    %15 = arith.maximumf %13, %14 : vector<16x64xf32>
    %16 = arith.truncf %15 : vector<16x64xf32> to vector<16x64xbf16>
    %c0_12 = arith.constant 0 : index
    %c0_13 = arith.constant 0 : index
    %17 = vector.load %arg6[%c0_12, %c0_13] : memref<64x64xbf16, #tpu.memory_space<vmem>>, vector<64x64xbf16>
    %cst_14 = arith.constant dense<0.000000e+00> : vector<16x64xf32>
    %18 = tpu.matmul %16, %17, %cst_14 {dimension_numbers = #tpu.dot_dimension_numbers<[1], [0], [0], [1], [0, 0, 1, 1], [], []>} : vector<16x64xbf16>, vector<64x64xbf16>, vector<16x64xf32> -> vector<16x64xf32>
    %c0_15 = arith.constant 0 : index
    %c0_16 = arith.constant 0 : index
    %19 = vector.load %arg7[%c0_15, %c0_16] : memref<1x64xf32, #tpu.memory_space<vmem>>, vector<1x64xf32>
    %20 = vector.broadcast %19 : vector<1x64xf32> to vector<16x64xf32>
    %21 = arith.addf %18, %20 : vector<16x64xf32>
    %cst_17 = arith.constant 0.000000e+00 : f32
    %22 = vector.broadcast %cst_17 : f32 to vector<16x64xf32>
    %23 = arith.maximumf %21, %22 : vector<16x64xf32>
    %24 = arith.truncf %23 : vector<16x64xf32> to vector<16x64xbf16>
    %c0_18 = arith.constant 0 : index
    %c0_19 = arith.constant 0 : index
    %25 = vector.load %arg8[%c0_18, %c0_19] : memref<64x64xbf16, #tpu.memory_space<vmem>>, vector<64x64xbf16>
    %cst_20 = arith.constant dense<0.000000e+00> : vector<16x64xf32>
    %26 = tpu.matmul %24, %25, %cst_20 {dimension_numbers = #tpu.dot_dimension_numbers<[1], [0], [0], [1], [0, 0, 1, 1], [], []>} : vector<16x64xbf16>, vector<64x64xbf16>, vector<16x64xf32> -> vector<16x64xf32>
    %c0_21 = arith.constant 0 : index
    %c0_22 = arith.constant 0 : index
    %27 = vector.load %arg9[%c0_21, %c0_22] : memref<1x64xf32, #tpu.memory_space<vmem>>, vector<1x64xf32>
    %28 = vector.broadcast %27 : vector<1x64xf32> to vector<16x64xf32>
    %29 = arith.addf %26, %28 : vector<16x64xf32>
    %cst_23 = arith.constant 0.000000e+00 : f32
    %30 = vector.broadcast %cst_23 : f32 to vector<16x64xf32>
    %31 = arith.maximumf %29, %30 : vector<16x64xf32>
    %32 = arith.truncf %31 : vector<16x64xf32> to vector<16x64xbf16>
    %c0_24 = arith.constant 0 : index
    %c0_25 = arith.constant 0 : index
    %33 = vector.load %arg10[%c0_24, %c0_25] : memref<64x128xbf16, #tpu.memory_space<vmem>>, vector<64x128xbf16>
    %cst_26 = arith.constant dense<0.000000e+00> : vector<16x128xf32>
    %34 = tpu.matmul %32, %33, %cst_26 {dimension_numbers = #tpu.dot_dimension_numbers<[1], [0], [0], [1], [0, 0, 1, 1], [], []>} : vector<16x64xbf16>, vector<64x128xbf16>, vector<16x128xf32> -> vector<16x128xf32>
    %c0_27 = arith.constant 0 : index
    %c0_28 = arith.constant 0 : index
    %35 = vector.load %arg11[%c0_27, %c0_28] : memref<1x128xf32, #tpu.memory_space<vmem>>, vector<1x128xf32>
    %36 = vector.broadcast %35 : vector<1x128xf32> to vector<16x128xf32>
    %37 = arith.addf %34, %36 : vector<16x128xf32>
    %38 = math.tanh %37 : vector<16x128xf32>
    %c0_29 = arith.constant 0 : index
    %c0_30 = arith.constant 0 : index
    %39 = vector.load %arg12[%c0_29, %c0_30] : memref<16x128xf32, #tpu.memory_space<vmem>>, vector<16x128xf32>
    tpu.vector_store %arg12[%c0_29, %c0_30], %38 {strides = array<i32>} : memref<16x128xf32, #tpu.memory_space<vmem>>, vector<16x128xf32>,
    return
  }
  func.func @transform_0(%arg0: i32) -> (i32, i32) {
    %c0_i32 = arith.constant 0 : i32
    %c0_i32_0 = arith.constant 0 : i32
    return %arg0, %c0_i32 : i32, i32
  }
  func.func @transform_1(%arg0: i32) -> (i32, i32) {
    %c0_i32 = arith.constant 0 : i32
    %c0_i32_0 = arith.constant 0 : i32
    %c0_i32_1 = arith.constant 0 : i32
    return %c0_i32, %c0_i32_0 : i32, i32
  }
  func.func @transform_2(%arg0: i32) -> (i32, i32) {
    %c0_i32 = arith.constant 0 : i32
    %c0_i32_0 = arith.constant 0 : i32
    %c0_i32_1 = arith.constant 0 : i32
    return %c0_i32, %c0_i32_0 : i32, i32
  }
  func.func @transform_3(%arg0: i32) -> (i32, i32) {
    %c0_i32 = arith.constant 0 : i32
    %c0_i32_0 = arith.constant 0 : i32
    %c0_i32_1 = arith.constant 0 : i32
    return %c0_i32, %c0_i32_0 : i32, i32
  }
  func.func @transform_4(%arg0: i32) -> (i32, i32) {
    %c0_i32 = arith.constant 0 : i32
    %c0_i32_0 = arith.constant 0 : i32
    %c0_i32_1 = arith.constant 0 : i32
    return %c0_i32, %c0_i32_0 : i32, i32
  }
  func.func @transform_5(%arg0: i32) -> (i32, i32) {
    %c0_i32 = arith.constant 0 : i32
    %c0_i32_0 = arith.constant 0 : i32
    %c0_i32_1 = arith.constant 0 : i32
    return %c0_i32, %c0_i32_0 : i32, i32
  }
  func.func @transform_6(%arg0: i32) -> (i32, i32) {
    %c0_i32 = arith.constant 0 : i32
    %c0_i32_0 = arith.constant 0 : i32
    %c0_i32_1 = arith.constant 0 : i32
    return %c0_i32, %c0_i32_0 : i32, i32
  }
  func.func @transform_7(%arg0: i32) -> (i32, i32) {
    %c0_i32 = arith.constant 0 : i32
    %c0_i32_0 = arith.constant 0 : i32
    %c0_i32_1 = arith.constant 0 : i32
    return %c0_i32, %c0_i32_0 : i32, i32
  }
  func.func @transform_8(%arg0: i32) -> (i32, i32) {
    %c0_i32 = arith.constant 0 : i32
    %c0_i32_0 = arith.constant 0 : i32
    %c0_i32_1 = arith.constant 0 : i32
    return %c0_i32, %c0_i32_0 : i32, i32
  }
  func.func @transform_9(%arg0: i32) -> (i32, i32) {
    %c0_i32 = arith.constant 0 : i32
    %c0_i32_0 = arith.constant 0 : i32
    %c0_i32_1 = arith.constant 0 : i32
    return %c0_i32, %c0_i32_0 : i32, i32
  }
  func.func @transform_10(%arg0: i32) -> (i32, i32) {
    %c0_i32 = arith.constant 0 : i32
    %c0_i32_0 = arith.constant 0 : i32
    %c0_i32_1 = arith.constant 0 : i32
    return %c0_i32, %c0_i32_0 : i32, i32
  }
  func.func @transform_11(%arg0: i32) -> (i32, i32) {
    %c0_i32 = arith.constant 0 : i32
    %c0_i32_0 = arith.constant 0 : i32
    return %arg0, %c0_i32 : i32, i32
  }
}

</mosaic_0001>

<llo_original>
// kernel: tpu_custom_call.1
$region0: #{tpu_custom_call.1}
  #allocation0 [shape = 'u32[]', space=smem, size = 0x4, offset = 0x4, fixed_abs, tag = 'smem constant byte address 0x4 - core index']
  #allocation1 [shape = 'u32[144,128]{1,0:T(1,128)}', space=vmem, size = 0x12000, scoped, tag = 'internal scratch']
  %s0 = inlined_call_operand.hbm [shape: bf16[32,32], index: 0, kind: input, shape index: {}]
  %s1 = inlined_call_operand.hbm [shape: bf16[32,64], index: 1, kind: input, shape index: {}]
  %s2 = inlined_call_operand.vmem [shape: f32[1,64], index: 2, kind: input, shape index: {}]
  %s3 = inlined_call_operand.hbm [shape: bf16[64,64], index: 3, kind: input, shape index: {}]
  %s4 = inlined_call_operand.vmem [shape: f32[1,64], index: 4, kind: input, shape index: {}]
  %s5 = inlined_call_operand.hbm [shape: bf16[64,64], index: 5, kind: input, shape index: {}]
  %s6 = inlined_call_operand.hbm [shape: f32[1,64], index: 6, kind: input, shape index: {}]
  %s7 = inlined_call_operand.hbm [shape: bf16[64,64], index: 7, kind: input, shape index: {}]
  %s8 = inlined_call_operand.hbm [shape: f32[1,64], index: 8, kind: input, shape index: {}]
  %s9 = inlined_call_operand.vmem [shape: bf16[64,128], index: 9, kind: input, shape index: {}]
  %s10 = inlined_call_operand.vmem [shape: f32[1,128], index: 10, kind: input, shape index: {}]
  %s11 = inlined_call_operand.hbm [shape: f32[32,128], index: 11, kind: output, shape index: {}]
  %s12 = sld [smem:[#allocation0]]
  $region105: #{tpu_custom_call.1} parent=0
    _
  %s14 = ssub.s32 1, %s12
  %s15 = scalar_select 0, %s14, %s12
  $region1: #{tpu_custom_call.1} parent=0
    #allocation2 [shape = 'u8[8192]{0}', space=vmem, size = 0x2000, scoped, tag = 'input window, operand 0']
    #allocation3 [shape = 's32[2]{0}', space=sflag, size = 0x8, scoped, tag = 'scoped memory for tpu_custom_call.1']
    #allocation4 [shape = 's32[2]{0}', space=sflag, size = 0x8, scoped, tag = 'scoped memory for tpu_custom_call.1']
    #allocation5 [shape = 'u8[8192]{0}', space=vmem, size = 0x2000, scoped, tag = 'input window, operand 1, single buffered']
    #allocation6 [shape = 's32[1]{0}', space=sflag, size = 0x4, scoped, tag = 'scoped memory for tpu_custom_call.1']
    #allocation7 [shape = 'u8[16384]{0}', space=vmem, size = 0x4000, scoped, tag = 'input window, operand 3, single buffered']
    #allocation8 [shape = 'u8[16384]{0}', space=vmem, size = 0x4000, scoped, tag = 'input window, operand 5, single buffered']
    #allocation9 [shape = 's32[1]{0}', space=sflag, size = 0x4, scoped, tag = 'scoped memory for tpu_custom_call.1']
    #allocation10 [shape = 'u8[512]{0}', space=vmem, size = 0x400, scoped, tag = 'input window, operand 6, single buffered']
    #allocation11 [shape = 'u8[16384]{0}', space=vmem, size = 0x4000, scoped, tag = 'input window, operand 7, single buffered']
    #allocation12 [shape = 's32[1]{0}', space=sflag, size = 0x4, scoped, tag = 'scoped memory for tpu_custom_call.1']
    #allocation13 [shape = 'u8[512]{0}', space=vmem, size = 0x400, scoped, tag = 'input window, operand 8, single buffered']
    #allocation14 [shape = 'u8[16384]{0}', space=vmem, size = 0x4000, scoped, tag = 'output window, operand 0']
    %16 = vsyncpa [#allocation3], 0
    %s17 = scalar_lea.sflag [#allocation3], 1
    %18 = vsyncpa %s17, 0
    %19 = vsyncpa [#allocation6], 0
    %20 = vsyncpa [#allocation9], 0
    %21 = vsyncpa [#allocation12], 0
    %22 = vsyncpa [#allocation4], 0
    %s23 = scalar_lea.sflag [#allocation4], 1
    %24 = vsyncpa %s23, 0
    loop: start=0, step=1, limit=4
    $region2: #{tpu_custom_call.1} parent=1 // loop_pre_header
      _
    $region3: #{tpu_custom_call.1} parent=1 // loop_header
      %s26 = sphi 0, %s30
      %p27 = scmp.ge.s32.totalorder %s26, 4
      %s36 = sphi 0, %s38
      %s39 = sphi 0, %s36
      %s40 = sphi 0, %s39
      %s56 = sphi 0, %s40
      %s60 = sphi 0, %s60
      %s62 = sphi 0, %s60
      %s63 = sphi 0, %s62
      %s77 = sphi 0, %s63
      %s81 = sphi 0, %s81
      %s83 = sphi 0, %s81
      %s84 = sphi 0, %s83
      %s98 = sphi 0, %s84
      %s102 = sphi 0, %s102
      %s104 = sphi 0, %s102
      %s105 = sphi 0, %s104
      %s119 = sphi 0, %s105
      %s123 = sphi 0, %s123
      %s125 = sphi 0, %s123
      %s126 = sphi 0, %s125
      %s140 = sphi 0, %s126
      %s144 = sphi 0, %s144
      %s146 = sphi 0, %s144
      %s147 = sphi 0, %s146
      %s161 = sphi 0, %s147
      %s165 = sphi 0, %s165
      %s167 = sphi 0, %s165
      %s168 = sphi 0, %s167
      %s182 = sphi 0, %s168
      %s186 = sphi 0, %s186
      %s188 = sphi 0, %s186
      %s189 = sphi 0, %s188
      %s203 = sphi 0, %s189
      %s207 = sphi 0, %s207
      %s209 = sphi 0, %s207
      %s210 = sphi 0, %s209
      %s224 = sphi 0, %s210
      %s228 = sphi 0, %s228
      %s230 = sphi 0, %s228
      %s231 = sphi 0, %s230
      %s245 = sphi 0, %s231
      %s249 = sphi 0, %s249
      %s251 = sphi 0, %s249
      %s252 = sphi 0, %s251
      %s266 = sphi 0, %s252
      %s272 = sphi 0, %s274
      %s275 = sphi 0, %s272
      %s276 = sphi 0, %s275
      %s292 = sphi 0, %s276
    $region4: #{tpu_custom_call.1} parent=1 // loop_header_branch
      %29 = sbr.rel (%p27) target = $region8
    $region5: #{tpu_custom_call.1} parent=1 // loop_body
      %s31 = ssub.s32 %s26, 1
      %s32 = ssub.s32 %s26, 2
      %s33 = sadd.s32 %s26, 1
      %s34 = ssub.s32 %s26, %s33
      %p35 = scmp.eq.s32.totalorder %s34, 0
      %s37 = sadd.s32 %s36, 1
      %s38 = scalar_select %p35, %s36, %s37
      %p41 = pneg %p35
      %p42 = scmp.eq.s32.totalorder %s26, 1
      %p43 = por %p41, %p42
      %p44 = scmp.ne.s32.totalorder %s36, %s39
      %p45 = scmp.eq.s32.totalorder %s26, 0
      %p46 = por %p44, %p45
      %p47 = scmp.ne.s32.totalorder %s36, %s39
      %p48 = scmp.eq.s32.totalorder %s31, 1
      %p49 = por %p47, %p48
      %p50 = scmp.ne.s32.totalorder %s39, %s40
      %p51 = scmp.eq.s32.totalorder %s31, 0
      %p52 = por %p50, %p51
      %p53 = scmp.ne.s32.totalorder %s39, %s40
      %p54 = scmp.eq.s32.totalorder %s32, 1
      %p55 = por %p53, %p54
      %p57 = scmp.ne.s32.totalorder %s40, %s56
      %p58 = scmp.eq.s32.totalorder %s32, 0
      %p59 = por %p57, %p58
      %s61 = sadd.s32 %s60, 1
      %p64 = scmp.eq.s32.totalorder %s26, 1
      %p65 = scmp.ne.s32.totalorder %s60, %s62
      %p66 = scmp.eq.s32.totalorder %s26, 0
      %p67 = por %p65, %p66
      %p68 = scmp.ne.s32.totalorder %s60, %s62
      %p69 = scmp.eq.s32.totalorder %s31, 1
      %p70 = por %p68, %p69
      %p71 = scmp.ne.s32.totalorder %s62, %s63
      %p72 = scmp.eq.s32.totalorder %s31, 0
      %p73 = por %p71, %p72
      %p74 = scmp.ne.s32.totalorder %s62, %s63
      %p75 = scmp.eq.s32.totalorder %s32, 1
      %p76 = por %p74, %p75
      %p78 = scmp.ne.s32.totalorder %s63, %s77
      %p79 = scmp.eq.s32.totalorder %s32, 0
      %p80 = por %p78, %p79
      %s82 = sadd.s32 %s81, 1
      %p85 = scmp.eq.s32.totalorder %s26, 1
      %p86 = scmp.ne.s32.totalorder %s81, %s83
      %p87 = scmp.eq.s32.totalorder %s26, 0
      %p88 = por %p86, %p87
      %p89 = scmp.ne.s32.totalorder %s81, %s83
      %p90 = scmp.eq.s32.totalorder %s31, 1
      %p91 = por %p89, %p90
      %p92 = scmp.ne.s32.totalorder %s83, %s84
      %p93 = scmp.eq.s32.totalorder %s31, 0
      %p94 = por %p92, %p93
      %p95 = scmp.ne.s32.totalorder %s83, %s84
      %p96 = scmp.eq.s32.totalorder %s32, 1
      %p97 = por %p95, %p96
      %p99 = scmp.ne.s32.totalorder %s84, %s98
      %p100 = scmp.eq.s32.totalorder %s32, 0
      %p101 = por %p99, %p100
      %s103 = sadd.s32 %s102, 1
      %p106 = scmp.eq.s32.totalorder %s26, 1
      %p107 = scmp.ne.s32.totalorder %s102, %s104
      %p108 = scmp.eq.s32.totalorder %s26, 0
      %p109 = por %p107, %p108
      %p110 = scmp.ne.s32.totalorder %s102, %s104
      %p111 = scmp.eq.s32.totalorder %s31, 1
      %p112 = por %p110, %p111
      %p113 = scmp.ne.s32.totalorder %s104, %s105
      %p114 = scmp.eq.s32.totalorder %s31, 0
      %p115 = por %p113, %p114
      %p116 = scmp.ne.s32.totalorder %s104, %s105
      %p117 = scmp.eq.s32.totalorder %s32, 1
      %p118 = por %p116, %p117
      %p120 = scmp.ne.s32.totalorder %s105, %s119
      %p121 = scmp.eq.s32.totalorder %s32, 0
      %p122 = por %p120, %p121
      %s124 = sadd.s32 %s123, 1
      %p127 = scmp.eq.s32.totalorder %s26, 1
      %p128 = scmp.ne.s32.totalorder %s123, %s125
      %p129 = scmp.eq.s32.totalorder %s26, 0
      %p130 = por %p128, %p129
      %p131 = scmp.ne.s32.totalorder %s123, %s125
      %p132 = scmp.eq.s32.totalorder %s31, 1
      %p133 = por %p131, %p132
      %p134 = scmp.ne.s32.totalorder %s125, %s126
      %p135 = scmp.eq.s32.totalorder %s31, 0
      %p136 = por %p134, %p135
      %p137 = scmp.ne.s32.totalorder %s125, %s126
      %p138 = scmp.eq.s32.totalorder %s32, 1
      %p139 = por %p137, %p138
      %p141 = scmp.ne.s32.totalorder %s126, %s140
      %p142 = scmp.eq.s32.totalorder %s32, 0
      %p143 = por %p141, %p142
      %s145 = sadd.s32 %s144, 1
      %p148 = scmp.eq.s32.totalorder %s26, 1
      %p149 = scmp.ne.s32.totalorder %s144, %s146
      %p150 = scmp.eq.s32.totalorder %s26, 0
      %p151 = por %p149, %p150
      %p152 = scmp.ne.s32.totalorder %s144, %s146
      %p153 = scmp.eq.s32.totalorder %s31, 1
      %p154 = por %p152, %p153
      %p155 = scmp.ne.s32.totalorder %s146, %s147
      %p156 = scmp.eq.s32.totalorder %s31, 0
      %p157 = por %p155, %p156
      %p158 = scmp.ne.s32.totalorder %s146, %s147
      %p159 = scmp.eq.s32.totalorder %s32, 1
      %p160 = por %p158, %p159
      %p162 = scmp.ne.s32.totalorder %s147, %s161
      %p163 = scmp.eq.s32.totalorder %s32, 0
      %p164 = por %p162, %p163
      %s166 = sadd.s32 %s165, 1
      %p169 = scmp.eq.s32.totalorder %s26, 1
      %p170 = scmp.ne.s32.totalorder %s165, %s167
      %p171 = scmp.eq.s32.totalorder %s26, 0
      %p172 = por %p170, %p171
      %p173 = scmp.ne.s32.totalorder %s165, %s167
      %p174 = scmp.eq.s32.totalorder %s31, 1
      %p175 = por %p173, %p174
      %p176 = scmp.ne.s32.totalorder %s167, %s168
      %p177 = scmp.eq.s32.totalorder %s31, 0
      %p178 = por %p176, %p177
      %p179 = scmp.ne.s32.totalorder %s167, %s168
      %p180 = scmp.eq.s32.totalorder %s32, 1
      %p181 = por %p179, %p180
      %p183 = scmp.ne.s32.totalorder %s168, %s182
      %p184 = scmp.eq.s32.totalorder %s32, 0
      %p185 = por %p183, %p184
      %s187 = sadd.s32 %s186, 1
      %p190 = scmp.eq.s32.totalorder %s26, 1
      %p191 = scmp.ne.s32.totalorder %s186, %s188
      %p192 = scmp.eq.s32.totalorder %s26, 0
      %p193 = por %p191, %p192
      %p194 = scmp.ne.s32.totalorder %s186, %s188
      %p195 = scmp.eq.s32.totalorder %s31, 1
      %p196 = por %p194, %p195
      %p197 = scmp.ne.s32.totalorder %s188, %s189
      %p198 = scmp.eq.s32.totalorder %s31, 0
      %p199 = por %p197, %p198
      %p200 = scmp.ne.s32.totalorder %s188, %s189
      %p201 = scmp.eq.s32.totalorder %s32, 1
      %p202 = por %p200, %p201
      %p204 = scmp.ne.s32.totalorder %s189, %s203
      %p205 = scmp.eq.s32.totalorder %s32, 0
      %p206 = por %p204, %p205
      %s208 = sadd.s32 %s207, 1
      %p211 = scmp.eq.s32.totalorder %s26, 1
      %p212 = scmp.ne.s32.totalorder %s207, %s209
      %p213 = scmp.eq.s32.totalorder %s26, 0
      %p214 = por %p212, %p213
      %p215 = scmp.ne.s32.totalorder %s207, %s209
      %p216 = scmp.eq.s32.totalorder %s31, 1
      %p217 = por %p215, %p216
      %p218 = scmp.ne.s32.totalorder %s209, %s210
      %p219 = scmp.eq.s32.totalorder %s31, 0
      %p220 = por %p218, %p219
      %p221 = scmp.ne.s32.totalorder %s209, %s210
      %p222 = scmp.eq.s32.totalorder %s32, 1
      %p223 = por %p221, %p222
      %p225 = scmp.ne.s32.totalorder %s210, %s224
      %p226 = scmp.eq.s32.totalorder %s32, 0
      %p227 = por %p225, %p226
      %s229 = sadd.s32 %s228, 1
      %p232 = scmp.eq.s32.totalorder %s26, 1
      %p233 = scmp.ne.s32.totalorder %s228, %s230
      %p234 = scmp.eq.s32.totalorder %s26, 0
      %p235 = por %p233, %p234
      %p236 = scmp.ne.s32.totalorder %s228, %s230
      %p237 = scmp.eq.s32.totalorder %s31, 1
      %p238 = por %p236, %p237
      %p239 = scmp.ne.s32.totalorder %s230, %s231
      %p240 = scmp.eq.s32.totalorder %s31, 0
      %p241 = por %p239, %p240
      %p242 = scmp.ne.s32.totalorder %s230, %s231
      %p243 = scmp.eq.s32.totalorder %s32, 1
      %p244 = por %p242, %p243
      %p246 = scmp.ne.s32.totalorder %s231, %s245
      %p247 = scmp.eq.s32.totalorder %s32, 0
      %p248 = por %p246, %p247
      %s250 = sadd.s32 %s249, 1
      %p253 = scmp.eq.s32.totalorder %s26, 1
      %p254 = scmp.ne.s32.totalorder %s249, %s251
      %p255 = scmp.eq.s32.totalorder %s26, 0
      %p256 = por %p254, %p255
      %p257 = scmp.ne.s32.totalorder %s249, %s251
      %p258 = scmp.eq.s32.totalorder %s31, 1
      %p259 = por %p257, %p258
      %p260 = scmp.ne.s32.totalorder %s251, %s252
      %p261 = scmp.eq.s32.totalorder %s31, 0
      %p262 = por %p260, %p261
      %p263 = scmp.ne.s32.totalorder %s251, %s252
      %p264 = scmp.eq.s32.totalorder %s32, 1
      %p265 = por %p263, %p264
      %p267 = scmp.ne.s32.totalorder %s252, %s266
      %p268 = scmp.eq.s32.totalorder %s32, 0
      %p269 = por %p267, %p268
      %s270 = ssub.s32 %s26, %s33
      %p271 = scmp.eq.s32.totalorder %s270, 0
      %s273 = sadd.s32 %s272, 1
      %s274 = scalar_select %p271, %s272, %s273
      %p277 = pneg %p271
      %p278 = scmp.eq.s32.totalorder %s26, 1
      %p279 = por %p277, %p278
      %p280 = scmp.ne.s32.totalorder %s272, %s275
      %p281 = scmp.eq.s32.totalorder %s26, 0
      %p282 = por %p280, %p281
      %p283 = scmp.ne.s32.totalorder %s272, %s275
      %p284 = scmp.eq.s32.totalorder %s31, 1
      %p285 = por %p283, %p284
      %p286 = scmp.ne.s32.totalorder %s275, %s276
      %p287 = scmp.eq.s32.totalorder %s31, 0
      %p288 = por %p286, %p287
      %p289 = scmp.ne.s32.totalorder %s275, %s276
      %p290 = scmp.eq.s32.totalorder %s32, 1
      %p291 = por %p289, %p290
      %p293 = scmp.ne.s32.totalorder %s276, %s292
      %p294 = scmp.eq.s32.totalorder %s32, 0
      %p295 = por %p293, %p294
      %p296 = scmp.le.s32.totalorder 1, %s26
      %p297 = scmp.lt.s32.totalorder %s26, 3
      %p298 = pnand %p296, %p297
      %p299 = pneg %p298
      // Predicated region
      $region9: #{tpu_custom_call.1} parent=5 // pred_check
        _
      $region10: #{tpu_custom_call.1} parent=5 // pred_check_branch
        %301 = sbr.rel (%p298) target = $region12
      $region11: #{tpu_custom_call.1} parent=5 // pred_region
        %s302 = ssub.s32 %s26, 1
        // Predicated region
        $region13: #{tpu_custom_call.1} parent=11 // pred_check
          %p303 = pneg %p73
        $region14: #{tpu_custom_call.1} parent=11 // pred_check_branch
          %305 = sbr.rel (%p303) target = $region16
        $region15: #{tpu_custom_call.1} parent=11 // pred_region
          %s307 = ssub.s32 256, 256
          %308 = vsyncadd [#allocation6], %s307
          %s309 = sshll.u32 [#allocation5], 4
          %s310 = int_to_ptr.vmem [resolvable:$true] %s309
          %315 = dma.hbm_to_vmem [thread:$0]  %s1, 256, %s310, [#allocation6], 64, 64, 4
        $region16: #{tpu_custom_call.1} parent=11 // pred_fallthru
          _
        // Predicated region
        $region17: #{tpu_custom_call.1} parent=11 // pred_check
          %p316 = pneg %p94
        $region18: #{tpu_custom_call.1} parent=11 // pred_check_branch
          %318 = sbr.rel (%p316) target = $region20
        $region19: #{tpu_custom_call.1} parent=11 // pred_region
          _
        $region20: #{tpu_custom_call.1} parent=11 // pred_fallthru
          _
        // Predicated region
        $region21: #{tpu_custom_call.1} parent=11 // pred_check
          %p319 = pneg %p115
        $region22: #{tpu_custom_call.1} parent=11 // pred_check_branch
          %321 = sbr.rel (%p319) target = $region24
        $region23: #{tpu_custom_call.1} parent=11 // pred_region
          %s323 = ssub.s32 512, 512
          %324 = vsyncadd [#allocation6], %s323
          %s325 = sshll.u32 [#allocation7], 4
          %s326 = int_to_ptr.vmem [resolvable:$true] %s325
          %331 = dma.hbm_to_vmem [thread:$0]  %s3, 512, %s326, [#allocation6], 64, 64, 4
        $region24: #{tpu_custom_call.1} parent=11 // pred_fallthru
          _
        // Predicated region
        $region25: #{tpu_custom_call.1} parent=11 // pred_check
          %p332 = pneg %p136
        $region26: #{tpu_custom_call.1} parent=11 // pred_check_branch
          %334 = sbr.rel (%p332) target = $region28
        $region27: #{tpu_custom_call.1} parent=11 // pred_region
          _
        $region28: #{tpu_custom_call.1} parent=11 // pred_fallthru
          _
        // Predicated region
        $region29: #{tpu_custom_call.1} parent=11 // pred_check
          %p335 = pneg %p157
        $region30: #{tpu_custom_call.1} parent=11 // pred_check_branch
          %337 = sbr.rel (%p335) target = $region32
        $region31: #{tpu_custom_call.1} parent=11 // pred_region
          %s339 = ssub.s32 512, 512
          %340 = vsyncadd [#allocation9], %s339
          %s341 = sshll.u32 [#allocation8], 4
          %s342 = int_to_ptr.vmem [resolvable:$true] %s341
          %347 = dma.hbm_to_vmem [thread:$0]  %s5, 512, %s342, [#allocation9], 64, 64, 4
        $region32: #{tpu_custom_call.1} parent=11 // pred_fallthru
          _
        // Predicated region
        $region33: #{tpu_custom_call.1} parent=11 // pred_check
          %p348 = pneg %p178
        $region34: #{tpu_custom_call.1} parent=11 // pred_check_branch
          %350 = sbr.rel (%p348) target = $region36
        $region35: #{tpu_custom_call.1} parent=11 // pred_region
          %s352 = ssub.s32 16, 16
          %353 = vsyncadd [#allocation9], %s352
          %s355 = sshll.u32 [#allocation10], 4
          %s356 = int_to_ptr.vmem [resolvable:$true] %s355
          %358 = dma.hbm_to_vmem [thread:$0]  %s6, 16, %s356, [#allocation9]
        $region36: #{tpu_custom_call.1} parent=11 // pred_fallthru
          _
        // Predicated region
        $region37: #{tpu_custom_call.1} parent=11 // pred_check
          %p359 = pneg %p199
        $region38: #{tpu_custom_call.1} parent=11 // pred_check_branch
          %361 = sbr.rel (%p359) target = $region40
        $region39: #{tpu_custom_call.1} parent=11 // pred_region
          %s363 = ssub.s32 512, 512
          %364 = vsyncadd [#allocation12], %s363
          %s365 = sshll.u32 [#allocation11], 4
          %s366 = int_to_ptr.vmem [resolvable:$true] %s365
          %371 = dma.hbm_to_vmem [thread:$0]  %s7, 512, %s366, [#allocation12], 64, 64, 4
        $region40: #{tpu_custom_call.1} parent=11 // pred_fallthru
          _
        // Predicated region
        $region41: #{tpu_custom_call.1} parent=11 // pred_check
          %p372 = pneg %p220
        $region42: #{tpu_custom_call.1} parent=11 // pred_check_branch
          %374 = sbr.rel (%p372) target = $region44
        $region43: #{tpu_custom_call.1} parent=11 // pred_region
          %s376 = ssub.s32 16, 16
          %377 = vsyncadd [#allocation12], %s376
          %s379 = sshll.u32 [#allocation13], 4
          %s380 = int_to_ptr.vmem [resolvable:$true] %s379
          %382 = dma.hbm_to_vmem [thread:$0]  %s8, 16, %s380, [#allocation12]
        $region44: #{tpu_custom_call.1} parent=11 // pred_fallthru
          _
        // Predicated region
        $region45: #{tpu_custom_call.1} parent=11 // pred_check
          %p383 = pneg %p241
        $region46: #{tpu_custom_call.1} parent=11 // pred_check_branch
          %385 = sbr.rel (%p383) target = $region48
        $region47: #{tpu_custom_call.1} parent=11 // pred_region
          _
        $region48: #{tpu_custom_call.1} parent=11 // pred_fallthru
          _
        // Predicated region
        $region49: #{tpu_custom_call.1} parent=11 // pred_check
          %p386 = pneg %p262
        $region50: #{tpu_custom_call.1} parent=11 // pred_check_branch
          %388 = sbr.rel (%p386) target = $region52
        $region51: #{tpu_custom_call.1} parent=11 // pred_region
          _
        $region52: #{tpu_custom_call.1} parent=11 // pred_fallthru
          _
      $region12: #{tpu_custom_call.1} parent=5 // pred_fallthru
        _
      %p389 = scmp.lt.s32.totalorder %s26, 2
      // Predicated region
      $region53: #{tpu_custom_call.1} parent=5 // pred_check
        %p390 = pneg %p389
      $region54: #{tpu_custom_call.1} parent=5 // pred_check_branch
        %392 = sbr.rel (%p390) target = $region56
      $region55: #{tpu_custom_call.1} parent=5 // pred_region
        // Predicated region
        $region57: #{tpu_custom_call.1} parent=55 // pred_check
          %p393 = pneg %p46
        $region58: #{tpu_custom_call.1} parent=55 // pred_check_branch
          %395 = sbr.rel (%p393) target = $region60
        $region59: #{tpu_custom_call.1} parent=55 // pred_region
          %s396 = sand.u32 %s36, 1
          %s397 = scalar_lea.sflag [#allocation3], %s396
          %s398 = sand.u32 %s36, 1
          %s399 = smul.addr %s398, 8
          %s400 = scalar_lea.vmem [#allocation2], %s399
          %s401 = smul.u32 2, %s26
          %s403 = ssub.s32 128, 128
          %404 = vsyncadd %s397, %s403
          %s405 = smul.addr %s401, 64
          %s406 = scalar_lea.hbm %s0, %s405
          %s407 = sshll.u32 %s400, 4
          %s408 = int_to_ptr.vmem [resolvable:$true] %s407
          %413 = dma.hbm_to_vmem [thread:$0]  %s406, 128, %s408, %s397, 64, 64, 4
        $region60: #{tpu_custom_call.1} parent=55 // pred_fallthru
          _
      $region56: #{tpu_custom_call.1} parent=5 // pred_fallthru
        _
      %p414 = scmp.le.s32.totalorder 1, %s26
      %p415 = scmp.lt.s32.totalorder %s26, 3
      %p416 = pnand %p414, %p415
      %p417 = pneg %p416
      // Predicated region
      $region61: #{tpu_custom_call.1} parent=5 // pred_check
        _
      $region62: #{tpu_custom_call.1} parent=5 // pred_check_branch
        %419 = sbr.rel (%p416) target = $region64
      $region63: #{tpu_custom_call.1} parent=5 // pred_region
        %s420 = ssub.s32 %s26, 1
        %s421 = sand.u32 %s39, 1
        %s422 = scalar_lea.sflag [#allocation3], %s421
        %s423 = sand.u32 %s39, 1
        %s424 = smul.addr %s423, 8
        %s425 = scalar_lea.vmem [#allocation2], %s424
        // Predicated region
        $region65: #{tpu_custom_call.1} parent=63 // pred_check
          %p426 = pneg %p52
        $region66: #{tpu_custom_call.1} parent=63 // pred_check_branch
          %428 = sbr.rel (%p426) target = $region68
        $region67: #{tpu_custom_call.1} parent=63 // pred_region
          %429 = dma.done %s422, 128
        $region68: #{tpu_custom_call.1} parent=63 // pred_fallthru
          _
        // Predicated region
        $region69: #{tpu_custom_call.1} parent=63 // pred_check
          %p430 = pneg %p73
        $region70: #{tpu_custom_call.1} parent=63 // pred_check_branch
          %432 = sbr.rel (%p430) target = $region72
        $region71: #{tpu_custom_call.1} parent=63 // pred_region
          %433 = dma.done [#allocation6], 256
        $region72: #{tpu_custom_call.1} parent=63 // pred_fallthru
          _
        // Predicated region
        $region73: #{tpu_custom_call.1} parent=63 // pred_check
          %p434 = pneg %p115
        $region74: #{tpu_custom_call.1} parent=63 // pred_check_branch
          %436 = sbr.rel (%p434) target = $region76
        $region75: #{tpu_custom_call.1} parent=63 // pred_region
          %437 = dma.done [#allocation6], 512
        $region76: #{tpu_custom_call.1} parent=63 // pred_fallthru
          _
        // Predicated region
        $region77: #{tpu_custom_call.1} parent=63 // pred_check
          %p438 = pneg %p157
        $region78: #{tpu_custom_call.1} parent=63 // pred_check_branch
          %440 = sbr.rel (%p438) target = $region80
        $region79: #{tpu_custom_call.1} parent=63 // pred_region
          %441 = dma.done [#allocation9], 512
        $region80: #{tpu_custom_call.1} parent=63 // pred_fallthru
          _
        // Predicated region
        $region81: #{tpu_custom_call.1} parent=63 // pred_check
          %p442 = pneg %p178
        $region82: #{tpu_custom_call.1} parent=63 // pred_check_branch
          %444 = sbr.rel (%p442) target = $region84
        $region83: #{tpu_custom_call.1} parent=63 // pred_region
          %445 = dma.done [#allocation9], 16
        $region84: #{tpu_custom_call.1} parent=63 // pred_fallthru
          _
        // Predicated region
        $region85: #{tpu_custom_call.1} parent=63 // pred_check
          %p446 = pneg %p199
        $region86: #{tpu_custom_call.1} parent=63 // pred_check_branch
          %448 = sbr.rel (%p446) target = $region88
        $region87: #{tpu_custom_call.1} parent=63 // pred_region
          %449 = dma.done [#allocation12], 512
        $region88: #{tpu_custom_call.1} parent=63 // pred_fallthru
          _
        // Predicated region
        $region89: #{tpu_custom_call.1} parent=63 // pred_check
          %p450 = pneg %p220
        $region90: #{tpu_custom_call.1} parent=63 // pred_check_branch
          %452 = sbr.rel (%p450) target = $region92
        $region91: #{tpu_custom_call.1} parent=63 // pred_region
          %453 = dma.done [#allocation12], 16
        $region92: #{tpu_custom_call.1} parent=63 // pred_fallthru
          _
        %s454 = sand.u32 %s39, 1
        %s455 = scalar_lea.sflag [#allocation3], %s454
        %s456 = sand.u32 %s39, 1
        %s457 = smul.addr %s456, 8
        %s458 = scalar_lea.vmem [#allocation2], %s457
        %p459 = pneg %p52
        %p460 = pneg %p49
        %p461 = pneg %p73
        %p462 = pneg %p70
        %p463 = pneg %p94
        %p464 = pneg %p91
        %p465 = pneg %p115
        %p466 = pneg %p112
        %p467 = pneg %p136
        %p468 = pneg %p133
        %p469 = pneg %p157
        %p470 = pneg %p154
        %p471 = pneg %p178
        %p472 = pneg %p175
        %p473 = pneg %p199
        %p474 = pneg %p196
        %p475 = pneg %p220
        %p476 = pneg %p217
        %p477 = pneg %p241
        %p478 = pneg %p238
        %p479 = pneg %p262
        %p480 = pneg %p259
        %p481 = pneg %p288
        %p482 = pneg %p285
        %s483 = sand.u32 %s275, 1
        %s484 = scalar_lea.sflag [#allocation4], %s483
        %s485 = sand.u32 %s275, 1
        %s486 = smul.addr %s485, 16
        %s487 = scalar_lea.vmem [#allocation14], %s486
        %s488 = smul.u32 2, %s31
        %s489 = smul.u32 2, %s31
        %v491 = vld [vmem:[%s425] sm:$0xf]
        %v492 = vld [vmem:[%s425 + $0x4] sm:$0xf]
        %v493 = vld [vmem:[#allocation5] sm:$0xf]
        %v494 = vld [vmem:[#allocation5 + $0x4] sm:$0xf]
        %v495 = vld [vmem:[#allocation5 + $0x8] sm:$0xf]
        %v496 = vld [vmem:[#allocation5 + $0xc] sm:$0xf]
        %v497 = vld [vmem:[%s2] sm:$0x1]
        %v499 = vlaneseq
        %v500 = vshrl.u32 %v499, 7
        %v501 = vsub.s32 0, %v500
        %v502 = vrot.slane %v497, %v501
        %v506 = vunpack.c.l.b16 %v491
        %v507 = vunpack.c.l.b16 %v492
        %v508 = vpack.c.b16 %v507, %v506
        %v513 = vunpack.c.l.b16 %v493
        %v514 = vunpack.c.l.b16 %v494
        %v515 = vunpack.c.l.b16 %v495
        %v516 = vunpack.c.l.b16 %v496
        %v517 = vpack.c.b16 %v514, %v513
        %v518 = vpack.c.b16 %v516, %v515
        %vm521 = vcmask 261120
        %v523 = vsel %vm521, %v508, 0
        %525 = vmatprep.subr.bf16.mxu0 0
        %526 = vmatpush1.bf16.msra.mxu0 %v517
        %527 = vmatprep.subr.bf16.mxu0 0
        %528 = vmatpush1.bf16.msra.mxu0 %v518
        %529 = vmatprep.subr.bf16.mxu0 0
        %530 = vmatpush1.bf16.msra.mxu0 0
        %531 = vmatprep.subr.bf16.mxu0 0
        %532 = vmatpush1.bf16.msra.mxu0 0
        %533 = vmatprep.subr.bf16.mxu0 0
        %534 = vmatpush1.bf16.msra.mxu0 0
        %535 = vmatprep.subr.bf16.mxu0 0
        %536 = vmatpush1.bf16.msra.mxu0 0
        %537 = vmatprep.subr.bf16.mxu0 0
        %538 = vmatpush1.bf16.msra.mxu0 0
        %539 = vmatprep.subr.bf16.mxu0 0
        %540 = vmatpush1.bf16.msra.mxu0 0
        %541 = vmatprep.subr.bf16.mxu0 0
        %542 = vmatpush1.bf16.msra.mxu0 0
        %543 = vmatprep.subr.bf16.mxu0 0
        %544 = vmatpush1.bf16.msra.mxu0 0
        %545 = vmatprep.subr.bf16.mxu0 0
        %546 = vmatpush1.bf16.msra.mxu0 0
        %547 = vmatprep.subr.bf16.mxu0 0
        %548 = vmatpush1.bf16.msra.mxu0 0
        %549 = vmatprep.subr.bf16.mxu0 0
        %550 = vmatpush1.bf16.msra.mxu0 0
        %551 = vmatprep.subr.bf16.mxu0 0
        %552 = vmatpush1.bf16.msra.mxu0 0
        %553 = vmatprep.subr.bf16.mxu0 0
        %554 = vmatpush1.bf16.msra.mxu0 0
        %555 = vmatprep.subr.bf16.mxu0 0
        %556 = vmatpush1.bf16.msra.mxu0 0
        %557 = vmatprep.mubr.bf16.mxu0 0
        %558 = vmatmul.mubr.bf16.gmra.mrb[0].mxu0 %v523
        %v559 = vpop.f32.mrb[0].mxu0
        %v560 = vadd.f32 %v502, %v559
        %v561 = vpop.f32.mrb[0].mxu0
        %v562 = vpop.f32.mrb[0].mxu0
        %v563 = vadd.f32 %v502, %v562
        %v564 = vpop.f32.mrb[0].mxu0
        %565 = vdwg.mxu0
        %v566 = vmax.f32 %v560, 0.0
        %v567 = vmax.f32 %v563, 0.0
        %v568 = vpack.c.bf16 %v567, %v566
        %v569 = vld [vmem:[#allocation7] sm:$0xf]
        %v570 = vld [vmem:[#allocation7 + $0x4] sm:$0xf]
        %v571 = vld [vmem:[#allocation7 + $0x8] sm:$0xf]
        %v572 = vld [vmem:[#allocation7 + $0xc] sm:$0xf]
        %v573 = vld [vmem:[#allocation7 + $0x10] sm:$0xf]
        %v574 = vld [vmem:[#allocation7 + $0x14] sm:$0xf]
        %v575 = vld [vmem:[#allocation7 + $0x18] sm:$0xf]
        %v576 = vld [vmem:[#allocation7 + $0x1c] sm:$0xf]
        %v577 = vld [vmem:[%s4] sm:$0x1]
        %v579 = vlaneseq
        %v580 = vshrl.u32 %v579, 7
        %v581 = vsub.s32 0, %v580
        %v582 = vrot.slane %v577, %v581
        %v592 = vunpack.c.l.b16 %v569
        %v593 = vunpack.c.l.b16 %v570
        %v594 = vunpack.c.l.b16 %v571
        %v595 = vunpack.c.l.b16 %v572
        %v596 = vunpack.c.l.b16 %v573
        %v597 = vunpack.c.l.b16 %v574
        %v598 = vunpack.c.l.b16 %v575
        %v599 = vunpack.c.l.b16 %v576
        %v600 = vpack.c.b16 %v593, %v592
        %v601 = vpack.c.b16 %v595, %v594
        %v602 = vpack.c.b16 %v597, %v596
        %v603 = vpack.c.b16 %v599, %v598
        %vm608 = vcmask 523264
        %v610 = vsel %vm608, %v568, 0
        %612 = vmatprep.subr.bf16.mxu0 0
        %613 = vmatpush1.bf16.msra.mxu0 %v600
        %614 = vmatprep.subr.bf16.mxu0 0
        %615 = vmatpush1.bf16.msra.mxu0 %v601
        %616 = vmatprep.subr.bf16.mxu0 0
        %617 = vmatpush1.bf16.msra.mxu0 %v602
        %618 = vmatprep.subr.bf16.mxu0 0
        %619 = vmatpush1.bf16.msra.mxu0 %v603
        %620 = vmatprep.subr.bf16.mxu0 0
        %621 = vmatpush1.bf16.msra.mxu0 0
        %622 = vmatprep.subr.bf16.mxu0 0
        %623 = vmatpush1.bf16.msra.mxu0 0
        %624 = vmatprep.subr.bf16.mxu0 0
        %625 = vmatpush1.bf16.msra.mxu0 0
        %626 = vmatprep.subr.bf16.mxu0 0
        %627 = vmatpush1.bf16.msra.mxu0 0
        %628 = vmatprep.subr.bf16.mxu0 0
        %629 = vmatpush1.bf16.msra.mxu0 0
        %630 = vmatprep.subr.bf16.mxu0 0
        %631 = vmatpush1.bf16.msra.mxu0 0
        %632 = vmatprep.subr.bf16.mxu0 0
        %633 = vmatpush1.bf16.msra.mxu0 0
        %634 = vmatprep.subr.bf16.mxu0 0
        %635 = vmatpush1.bf16.msra.mxu0 0
        %636 = vmatprep.subr.bf16.mxu0 0
        %637 = vmatpush1.bf16.msra.mxu0 0
        %638 = vmatprep.subr.bf16.mxu0 0
        %639 = vmatpush1.bf16.msra.mxu0 0
        %640 = vmatprep.subr.bf16.mxu0 0
        %641 = vmatpush1.bf16.msra.mxu0 0
        %642 = vmatprep.subr.bf16.mxu0 0
        %643 = vmatpush1.bf16.msra.mxu0 0
        %644 = vmatprep.mubr.bf16.mxu0 0
        %645 = vmatmul.mubr.bf16.gmra.mrb[0].mxu0 %v610
        %v646 = vpop.f32.mrb[0].mxu0
        %v647 = vadd.f32 %v582, %v646
        %v648 = vpop.f32.mrb[0].mxu0
        %v649 = vpop.f32.mrb[0].mxu0
        %v650 = vadd.f32 %v582, %v649
        %v651 = vpop.f32.mrb[0].mxu0
        %652 = vdwg.mxu0
        %v653 = vmax.f32 %v647, 0.0
        %v654 = vmax.f32 %v650, 0.0
        %v655 = vpack.c.bf16 %v654, %v653
        %v656 = vld [vmem:[#allocation8] sm:$0xf]
        %v657 = vld [vmem:[#allocation8 + $0x4] sm:$0xf]
        %v658 = vld [vmem:[#allocation8 + $0x8] sm:$0xf]
        %v659 = vld [vmem:[#allocation8 + $0xc] sm:$0xf]
        %v660 = vld [vmem:[#allocation8 + $0x10] sm:$0xf]
        %v661 = vld [vmem:[#allocation8 + $0x14] sm:$0xf]
        %v662 = vld [vmem:[#allocation8 + $0x18] sm:$0xf]
        %v663 = vld [vmem:[#allocation8 + $0x1c] sm:$0xf]
        %v664 = vld [vmem:[#allocation10] sm:$0x1]
        %v666 = vlaneseq
        %v667 = vshrl.u32 %v666, 7
        %v668 = vsub.s32 0, %v667
        %v669 = vrot.slane %v664, %v668
        %v679 = vunpack.c.l.b16 %v656
        %v680 = vunpack.c.l.b16 %v657
        %v681 = vunpack.c.l.b16 %v658
        %v682 = vunpack.c.l.b16 %v659
        %v683 = vunpack.c.l.b16 %v660
        %v684 = vunpack.c.l.b16 %v661
        %v685 = vunpack.c.l.b16 %v662
        %v686 = vunpack.c.l.b16 %v663
        %v687 = vpack.c.b16 %v680, %v679
        %v688 = vpack.c.b16 %v682, %v681
        %v689 = vpack.c.b16 %v684, %v683
        %v690 = vpack.c.b16 %v686, %v685
        %v696 = vsel %vm608, %v655, 0
        %698 = vmatprep.subr.bf16.mxu0 0
        %699 = vmatpush1.bf16.msra.mxu0 %v687
        %700 = vmatprep.subr.bf16.mxu0 0
        %701 = vmatpush1.bf16.msra.mxu0 %v688
        %702 = vmatprep.subr.bf16.mxu0 0
        %703 = vmatpush1.bf16.msra.mxu0 %v689
        %704 = vmatprep.subr.bf16.mxu0 0
        %705 = vmatpush1.bf16.msra.mxu0 %v690
        %706 = vmatprep.subr.bf16.mxu0 0
        %707 = vmatpush1.bf16.msra.mxu0 0
        %708 = vmatprep.subr.bf16.mxu0 0
        %709 = vmatpush1.bf16.msra.mxu0 0
        %710 = vmatprep.subr.bf16.mxu0 0
        %711 = vmatpush1.bf16.msra.mxu0 0
        %712 = vmatprep.subr.bf16.mxu0 0
        %713 = vmatpush1.bf16.msra.mxu0 0
        %714 = vmatprep.subr.bf16.mxu0 0
        %715 = vmatpush1.bf16.msra.mxu0 0
        %716 = vmatprep.subr.bf16.mxu0 0
        %717 = vmatpush1.bf16.msra.mxu0 0
        %718 = vmatprep.subr.bf16.mxu0 0
        %719 = vmatpush1.bf16.msra.mxu0 0
        %720 = vmatprep.subr.bf16.mxu0 0
        %721 = vmatpush1.bf16.msra.mxu0 0
        %722 = vmatprep.subr.bf16.mxu0 0
        %723 = vmatpush1.bf16.msra.mxu0 0
        %724 = vmatprep.subr.bf16.mxu0 0
        %725 = vmatpush1.bf16.msra.mxu0 0
        %726 = vmatprep.subr.bf16.mxu0 0
        %727 = vmatpush1.bf16.msra.mxu0 0
        %728 = vmatprep.subr.bf16.mxu0 0
        %729 = vmatpush1.bf16.msra.mxu0 0
        %730 = vmatprep.mubr.bf16.mxu0 0
        %731 = vmatmul.mubr.bf16.gmra.mrb[0].mxu0 %v696
        %v732 = vpop.f32.mrb[0].mxu0
        %v733 = vadd.f32 %v669, %v732
        %v734 = vpop.f32.mrb[0].mxu0
        %v735 = vpop.f32.mrb[0].mxu0
        %v736 = vadd.f32 %v669, %v735
        %v737 = vpop.f32.mrb[0].mxu0
        %738 = vdwg.mxu0
        %v739 = vmax.f32 %v733, 0.0
        %v740 = vmax.f32 %v736, 0.0
        %v741 = vpack.c.bf16 %v740, %v739
        %v742 = vld [vmem:[#allocation11] sm:$0xf]
        %v743 = vld [vmem:[#allocation11 + $0x4] sm:$0xf]
        %v744 = vld [vmem:[#allocation11 + $0x8] sm:$0xf]
        %v745 = vld [vmem:[#allocation11 + $0xc] sm:$0xf]
        %v746 = vld [vmem:[#allocation11 + $0x10] sm:$0xf]
        %v747 = vld [vmem:[#allocation11 + $0x14] sm:$0xf]
        %v748 = vld [vmem:[#allocation11 + $0x18] sm:$0xf]
        %v749 = vld [vmem:[#allocation11 + $0x1c] sm:$0xf]
        %v750 = vld [vmem:[#allocation13] sm:$0x1]
        %v752 = vlaneseq
        %v753 = vshrl.u32 %v752, 7
        %v754 = vsub.s32 0, %v753
        %v755 = vrot.slane %v750, %v754
        %v765 = vunpack.c.l.b16 %v742
        %v766 = vunpack.c.l.b16 %v743
        %v767 = vunpack.c.l.b16 %v744
        %v768 = vunpack.c.l.b16 %v745
        %v769 = vunpack.c.l.b16 %v746
        %v770 = vunpack.c.l.b16 %v747
        %v771 = vunpack.c.l.b16 %v748
        %v772 = vunpack.c.l.b16 %v749
        %v773 = vpack.c.b16 %v766, %v765
        %v774 = vpack.c.b16 %v768, %v767
        %v775 = vpack.c.b16 %v770, %v769
        %v776 = vpack.c.b16 %v772, %v771
        %v782 = vsel %vm608, %v741, 0
        %784 = vmatprep.subr.bf16.mxu0 0
        %785 = vmatpush1.bf16.msra.mxu0 %v773
        %786 = vmatprep.subr.bf16.mxu0 0
        %787 = vmatpush1.bf16.msra.mxu0 %v774
        %788 = vmatprep.subr.bf16.mxu0 0
        %789 = vmatpush1.bf16.msra.mxu0 %v775
        %790 = vmatprep.subr.bf16.mxu0 0
        %791 = vmatpush1.bf16.msra.mxu0 %v776
        %792 = vmatprep.subr.bf16.mxu0 0
        %793 = vmatpush1.bf16.msra.mxu0 0
        %794 = vmatprep.subr.bf16.mxu0 0
        %795 = vmatpush1.bf16.msra.mxu0 0
        %796 = vmatprep.subr.bf16.mxu0 0
        %797 = vmatpush1.bf16.msra.mxu0 0
        %798 = vmatprep.subr.bf16.mxu0 0
        %799 = vmatpush1.bf16.msra.mxu0 0
        %800 = vmatprep.subr.bf16.mxu0 0
        %801 = vmatpush1.bf16.msra.mxu0 0
        %802 = vmatprep.subr.bf16.mxu0 0
        %803 = vmatpush1.bf16.msra.mxu0 0
        %804 = vmatprep.subr.bf16.mxu0 0
        %805 = vmatpush1.bf16.msra.mxu0 0
        %806 = vmatprep.subr.bf16.mxu0 0
        %807 = vmatpush1.bf16.msra.mxu0 0
        %808 = vmatprep.subr.bf16.mxu0 0
        %809 = vmatpush1.bf16.msra.mxu0 0
        %810 = vmatprep.subr.bf16.mxu0 0
        %811 = vmatpush1.bf16.msra.mxu0 0
        %812 = vmatprep.subr.bf16.mxu0 0
        %813 = vmatpush1.bf16.msra.mxu0 0
        %814 = vmatprep.subr.bf16.mxu0 0
        %815 = vmatpush1.bf16.msra.mxu0 0
        %816 = vmatprep.mubr.bf16.mxu0 0
        %817 = vmatmul.mubr.bf16.gmra.mrb[0].mxu0 %v782
        %v818 = vpop.f32.mrb[0].mxu0
        %v819 = vadd.f32 %v755, %v818
        %v820 = vpop.f32.mrb[0].mxu0
        %v821 = vpop.f32.mrb[0].mxu0
        %v822 = vadd.f32 %v755, %v821
        %v823 = vpop.f32.mrb[0].mxu0
        %824 = vdwg.mxu0
        %v825 = vmax.f32 %v819, 0.0
        %v826 = vmax.f32 %v822, 0.0
        %v827 = vpack.c.bf16 %v826, %v825
        %v828 = vld [vmem:[%s9] sm:$0xf]
        %v829 = vld [vmem:[%s9 + $0x4] sm:$0xf]
        %v830 = vld [vmem:[%s9 + $0x8] sm:$0xf]
        %v831 = vld [vmem:[%s9 + $0xc] sm:$0xf]
        %v832 = vld [vmem:[%s9 + $0x10] sm:$0xf]
        %v833 = vld [vmem:[%s9 + $0x14] sm:$0xf]
        %v834 = vld [vmem:[%s9 + $0x18] sm:$0xf]
        %v835 = vld [vmem:[%s9 + $0x1c] sm:$0xf]
        %v836 = vld [vmem:[%s10] sm:$0x1]
        %v838 = vlaneseq
        %v839 = vshrl.u32 %v838, 7
        %v840 = vsub.s32 0, %v839
        %v841 = vrot.slane %v836, %v840
        %v851 = vunpack.c.l.b16 %v828
        %v852 = vunpack.c.l.b16 %v829
        %v853 = vunpack.c.l.b16 %v830
        %v854 = vunpack.c.l.b16 %v831
        %v855 = vunpack.c.l.b16 %v832
        %v856 = vunpack.c.l.b16 %v833
        %v857 = vunpack.c.l.b16 %v834
        %v858 = vunpack.c.l.b16 %v835
        %v859 = vpack.c.b16 %v852, %v851
        %v860 = vpack.c.b16 %v854, %v853
        %v861 = vpack.c.b16 %v856, %v855
        %v862 = vpack.c.b16 %v858, %v857
        %v868 = vsel %vm608, %v827, 0
        %870 = vmatprep.subr.bf16.mxu0 0
        %871 = vmatpush1.bf16.msra.mxu0 %v859
        %872 = vmatprep.subr.bf16.mxu0 0
        %873 = vmatpush1.bf16.msra.mxu0 %v860
        %874 = vmatprep.subr.bf16.mxu0 0
        %875 = vmatpush1.bf16.msra.mxu0 %v861
        %876 = vmatprep.subr.bf16.mxu0 0
        %877 = vmatpush1.bf16.msra.mxu0 %v862
        %878 = vmatprep.subr.bf16.mxu0 0
        %879 = vmatpush1.bf16.msra.mxu0 0
        %880 = vmatprep.subr.bf16.mxu0 0
        %881 = vmatpush1.bf16.msra.mxu0 0
        %882 = vmatprep.subr.bf16.mxu0 0
        %883 = vmatpush1.bf16.msra.mxu0 0
        %884 = vmatprep.subr.bf16.mxu0 0
        %885 = vmatpush1.bf16.msra.mxu0 0
        %886 = vmatprep.subr.bf16.mxu0 0
        %887 = vmatpush1.bf16.msra.mxu0 0
        %888 = vmatprep.subr.bf16.mxu0 0
        %889 = vmatpush1.bf16.msra.mxu0 0
        %890 = vmatprep.subr.bf16.mxu0 0
        %891 = vmatpush1.bf16.msra.mxu0 0
        %892 = vmatprep.subr.bf16.mxu0 0
        %893 = vmatpush1.bf16.msra.mxu0 0
        %894 = vmatprep.subr.bf16.mxu0 0
        %895 = vmatpush1.bf16.msra.mxu0 0
        %896 = vmatprep.subr.bf16.mxu0 0
        %897 = vmatpush1.bf16.msra.mxu0 0
        %898 = vmatprep.subr.bf16.mxu0 0
        %899 = vmatpush1.bf16.msra.mxu0 0
        %900 = vmatprep.subr.bf16.mxu0 0
        %901 = vmatpush1.bf16.msra.mxu0 0
        %902 = vmatprep.mubr.bf16.mxu0 0
        %903 = vmatmul.mubr.bf16.gmra.mrb[0].mxu0 %v868
        %v904 = vpop.f32.mrb[0].mxu0
        %v905 = vadd.f32 %v841, %v904
        %v906 = vpop.f32.mrb[0].mxu0
        %v907 = vpop.f32.mrb[0].mxu0
        %v908 = vadd.f32 %v841, %v907
        %v909 = vpop.f32.mrb[0].mxu0
        %910 = vdwg.mxu0
        %v911 = vtanh.pop %v905
        %v912 = vtanh.pop %v908
        %913 = vst [vmem:[%s487] sm:$0xff] %v911
        %914 = vst [vmem:[%s487 + $0x8] sm:$0xff] %v912
        %s915 = sand.u32 %s275, 1
        %s916 = scalar_lea.sflag [#allocation4], %s915
        %s917 = sand.u32 %s275, 1
        %s918 = smul.addr %s917, 16
        %s919 = scalar_lea.vmem [#allocation14], %s918
        // Predicated region
        $region93: #{tpu_custom_call.1} parent=63 // pred_check
          %p920 = pneg %p285
        $region94: #{tpu_custom_call.1} parent=63 // pred_check_branch
          %922 = sbr.rel (%p920) target = $region96
        $region95: #{tpu_custom_call.1} parent=63 // pred_region
          %s923 = smul.u32 2, %s31
          %s925 = ssub.s32 256, 256
          %926 = vsyncadd %s916, %s925
          %s927 = smul.addr %s923, 128
          %s928 = scalar_lea.hbm %s11, %s927
          %s929 = sshll.u32 %s919, 4
          %s930 = int_to_ptr.vmem [resolvable:$true] %s929
          %935 = dma.vmem_to_hbm [thread:$0]  %s930, 256, %s928, %s916, 128, 128, 8
        $region96: #{tpu_custom_call.1} parent=63 // pred_fallthru
          _
      $region64: #{tpu_custom_call.1} parent=5 // pred_fallthru
        _
      %p936 = scmp.le.s32.totalorder 2, %s26
      // Predicated region
      $region97: #{tpu_custom_call.1} parent=5 // pred_check
        %p937 = pneg %p936
      $region98: #{tpu_custom_call.1} parent=5 // pred_check_branch
        %939 = sbr.rel (%p937) target = $region100
      $region99: #{tpu_custom_call.1} parent=5 // pred_region
        %s940 = ssub.s32 %s26, 2
        // Predicated region
        $region101: #{tpu_custom_call.1} parent=99 // pred_check
          %p941 = pneg %p291
        $region102: #{tpu_custom_call.1} parent=99 // pred_check_branch
          %943 = sbr.rel (%p941) target = $region104
        $region103: #{tpu_custom_call.1} parent=99 // pred_region
          %s944 = sand.u32 %s276, 1
          %s945 = scalar_lea.sflag [#allocation4], %s944
          %s946 = sand.u32 %s276, 1
          %s947 = smul.addr %s946, 16
          %s948 = scalar_lea.vmem [#allocation14], %s947
          %949 = dma.done %s945, 256
        $region104: #{tpu_custom_call.1} parent=99 // pred_fallthru
          _
      $region100: #{tpu_custom_call.1} parent=5 // pred_fallthru
        _
    $region6: #{tpu_custom_call.1} parent=1 // loop_footer
      %s30 = sadd.s32 1, %s26
    $region7: #{tpu_custom_call.1} parent=1 // loop_footer_branch
      %25 = sbr.rel target = $region3
    $region8: #{tpu_custom_call.1} parent=1 // loop_exit
      _
    %950 = vsyncpa [#allocation3], 1
    %s951 = scalar_lea.sflag [#allocation3], 1
    %952 = vsyncpa %s951, 1
    %953 = vsyncpa [#allocation6], 1
    %954 = vsyncpa [#allocation9], 1
    %955 = vsyncpa [#allocation12], 1
    %956 = vsyncpa [#allocation4], 1
    %s957 = scalar_lea.sflag [#allocation4], 1
    %958 = vsyncpa %s957, 1

</llo_original>
